<compile_context>
chip_gen: v7x
topology: tpu7x:2x2x1
jax: 0.10.0
libtpu: 0.0.40
codegen_flags: <defaults>
</compile_context>

<pallas_src>
import math
from functools import partial

import jax
import jax.numpy as jnp
from jax import lax
from jax.experimental import pallas as pl
from jax.experimental.pallas import tpu as pltpu


def _qkv_proj_kernel(x_ref, wq_ref, wk_ref, wv_ref, b_ref,
                     q_ref, k_ref, v_ref):
    """Project one tile of tokens to Q (pre-scaled), K, V in bf16.

    x_ref     : (TP, E)      bf16  token rows (batch-major flattened)
    w*_ref    : (E, E_pad)   bf16  pre-transposed in-proj weights (Wq scaled)
    b_ref     : (8, E_pad)   f32   packed biases: rows 0..3 = bq*scale, bk, bv, bo
    q/k/v_ref : (TP, E_pad)  bf16
    """
    x = x_ref[...]
    b = b_ref[...]
    q = jnp.dot(x, wq_ref[...], preferred_element_type=jnp.float32) + b[0:1, :]
    k = jnp.dot(x, wk_ref[...], preferred_element_type=jnp.float32) + b[1:2, :]
    v = jnp.dot(x, wv_ref[...], preferred_element_type=jnp.float32) + b[2:3, :]
    q_ref[...] = q.astype(q_ref.dtype)
    k_ref[...] = k.astype(k_ref.dtype)
    v_ref[...] = v.astype(v_ref.dtype)


def _attn_kernel(q_ref, k_ref, v_ref, wo_ref, b_ref, o_ref,
                 *, n_head: int, head_dim: int):
    """Attention + out-projection for one (batch, query-tile) grid step.

    q_ref : (TQ, E_pad) bf16   query rows (scale folded into Wq/bq)
    k_ref : (L,  E_pad) bf16   keys for this batch (resident across q tiles)
    v_ref : (L,  E_pad) bf16   values for this batch
    wo_ref: (E_pad, E_pad) bf16  pre-transposed out-proj weight
    b_ref : (8, E_pad)  f32    packed biases (row 3 = out-proj bias)
    o_ref : (TQ, E_pad) f32    lane-dense output block
    """
    d = head_dim
    q = q_ref[...]
    k = k_ref[...]
    v = v_ref[...]
    wo = wo_ref[...]

    head_outs = []
    for h in range(n_head):               # static unroll over heads
        lo = h * d
        qh = q[:, lo:lo + d]              # (TQ, d) bf16
        kh = k[:, lo:lo + d]              # (L,  d) bf16
        vh = v[:, lo:lo + d]              # (L,  d) bf16

        # q @ k^T without materializing a transpose: contract the last dims.
        s = lax.dot_general(qh, kh, (((1,), (1,)), ((), ())),
                            preferred_element_type=jnp.float32)      # (TQ, L)
        s = s - jnp.max(s, axis=-1, keepdims=True)
        p = jnp.exp(s)
        p = p * pl.reciprocal(jnp.sum(p, axis=-1, keepdims=True), approx=True)
        head_outs.append(jnp.dot(p.astype(jnp.bfloat16), vh,
                                 preferred_element_type=jnp.float32))  # (TQ, d)

    if d % 128 == 0:
        # Lane-aligned heads: concat is free, one full-depth matmul keeps the
        # MXU contraction pipe full.
        ctx = jnp.concatenate(head_outs, axis=-1).astype(jnp.bfloat16)
        out = jnp.dot(ctx, wo[0:n_head * d, :],
                      preferred_element_type=jnp.float32)
    else:
        # Small head_dim: fuse the out-projection per head (avoids sub-128
        # lane concatenation / relayouts).
        out = jnp.zeros((q.shape[0], o_ref.shape[-1]), jnp.float32)
        for h in range(n_head):
            lo = h * d
            out = out + jnp.dot(head_outs[h].astype(jnp.bfloat16),
                                wo[lo:lo + d, :],
                                preferred_element_type=jnp.float32)

    o_ref[...] = (out + b_ref[3:4, :]).astype(o_ref.dtype)


def _pick_tile(total: int, target: int) -> int:
    """Largest tile <= target that divides `total` and is a multiple of 8;
    falls back to the full extent."""
    if total <= target:
        return total
    t = (target // 8) * 8
    while t >= 8:
        if total % t == 0:
            return t
        t -= 8
    return total


def _vmem_limit_bytes(block_bytes):
    total = sum(2 * b for b in block_bytes)   # Pallas double-buffers blocks
    limit = 2 * total + (8 << 20)             # headroom for temporaries
    return int(max(32 << 20, min(limit, 64 << 20)))


def self_multihead_attention(x_lne, w_in, b_in, w_out, b_out, *, n_head: int,
                             q_tile: int | None = None):
    """x_lne: (L, N, E) float32, PyTorch MultiheadAttention layout.

    w_in:  (3E, E)  in_proj_weight
    b_in:  (3E,)    in_proj_bias
    w_out: (E, E)   out_proj.weight
    b_out: (E,)     out_proj.bias
    Returns (L, N, E), matching `self.attn(x, x, x)[0]`.
    """
    L, N, E = x_lne.shape
    head_dim = E // n_head
    assert head_dim * n_head == E
    scale = 1.0 / math.sqrt(head_dim)
    E_pad = ((E + 127) // 128) * 128          # lane-dense output width

    # ---- one-time weight/bias prep (small static tensors) -------------------
    def pad2(w, rows, cols):
        return jnp.pad(w, ((0, rows - w.shape[0]), (0, cols - w.shape[1])))

    wq_t = pad2(w_in[0 * E:1 * E].T * scale, E, E_pad).astype(jnp.bfloat16)
    wk_t = pad2(w_in[1 * E:2 * E].T, E, E_pad).astype(jnp.bfloat16)
    wv_t = pad2(w_in[2 * E:3 * E].T, E, E_pad).astype(jnp.bfloat16)
    wo_t = pad2(w_out.T, E_pad, E_pad).astype(jnp.bfloat16)

    b_pack = jnp.zeros((8, E_pad), jnp.float32)
    b_pack = b_pack.at[0, :E].set(b_in[0 * E:1 * E] * scale)
    b_pack = b_pack.at[1, :E].set(b_in[1 * E:2 * E])
    b_pack = b_pack.at[2, :E].set(b_in[2 * E:3 * E])
    b_pack = b_pack.at[3, :E].set(b_out)

    # bf16 activations, batch-major token rows (single XLA transpose + cast).
    x_rows = jnp.transpose(x_lne, (1, 0, 2)).astype(jnp.bfloat16)
    x_rows = x_rows.reshape(N * L, E)

    # ---- kernel 1: Q/K/V projection, computed ONCE --------------------------
    TP = _pick_tile(N * L, 512)
    proj_blocks = [TP * E * 2, 3 * E * E_pad * 2, 8 * E_pad * 4,
                   3 * TP * E_pad * 2]
    q_all, k_all, v_all = pl.pallas_call(
        _qkv_proj_kernel,
        out_shape=(jax.ShapeDtypeStruct((N * L, E_pad), jnp.bfloat16),) * 3,
        grid=(N * L // TP,),
        in_specs=[
            pl.BlockSpec((TP, E), lambda i: (i, 0)),        # token tile
            pl.BlockSpec((E, E_pad), lambda i: (0, 0)),     # Wq (scaled)
            pl.BlockSpec((E, E_pad), lambda i: (0, 0)),     # Wk
            pl.BlockSpec((E, E_pad), lambda i: (0, 0)),     # Wv
            pl.BlockSpec((8, E_pad), lambda i: (0, 0)),     # packed biases
        ],
        out_specs=(
            pl.BlockSpec((TP, E_pad), lambda i: (i, 0)),
            pl.BlockSpec((TP, E_pad), lambda i: (i, 0)),
            pl.BlockSpec((TP, E_pad), lambda i: (i, 0)),
        ),
        compiler_params=pltpu.CompilerParams(
            dimension_semantics=("parallel",),
            vmem_limit_bytes=_vmem_limit_bytes(proj_blocks)),
    )(x_rows, wq_t, wk_t, wv_t, b_pack)

    q_all = q_all.reshape(N, L, E_pad)        # free, contiguous reshapes
    k_all = k_all.reshape(N, L, E_pad)
    v_all = v_all.reshape(N, L, E_pad)

    # ---- kernel 2: attention + out-projection over (batch, q-tile) grid -----
    if q_tile is None:
        q_tile = _pick_tile(L, 256)           # MXU-sized query tiles
    assert L % q_tile == 0 and (q_tile % 8 == 0 or q_tile == L)
    attn_blocks = [q_tile * E_pad * 2, 2 * L * E_pad * 2, E_pad * E_pad * 2,
                   8 * E_pad * 4, q_tile * E_pad * 4]

    kernel = partial(_attn_kernel, n_head=n_head, head_dim=head_dim)
    out_nle = pl.pallas_call(
        kernel,
        out_shape=jax.ShapeDtypeStruct((N, L, E_pad), jnp.float32),
        grid=(N, L // q_tile),
        in_specs=[
            pl.BlockSpec((None, q_tile, E_pad), lambda n, i: (n, i, 0)),  # Q tile
            pl.BlockSpec((None, L, E_pad), lambda n, i: (n, 0, 0)),       # K (per-batch resident)
            pl.BlockSpec((None, L, E_pad), lambda n, i: (n, 0, 0)),       # V (per-batch resident)
            pl.BlockSpec((E_pad, E_pad), lambda n, i: (0, 0)),            # Wo
            pl.BlockSpec((8, E_pad), lambda n, i: (0, 0)),                # packed biases
        ],
        out_specs=pl.BlockSpec((None, q_tile, E_pad), lambda n, i: (n, i, 0)),
        compiler_params=pltpu.CompilerParams(
            dimension_semantics=("parallel", "parallel"),
            vmem_limit_bytes=_vmem_limit_bytes(attn_blocks)),
    )(q_all, k_all, v_all, wo_t, b_pack)

    # Back to PyTorch's (L, N, E) layout: one XLA permute + pad slice.
    out = jnp.transpose(out_nle[:, :, :E], (1, 0, 2))
    return out.astype(x_lne.dtype)


def _reference(x_lne, w_in, b_in, w_out, b_out, *, n_head: int):
    """Pure-JAX f32 reference mirroring torch.nn.MultiheadAttention forward."""
    L, N, E = x_lne.shape
    d = E // n_head
    qkv = jnp.einsum("lne,fe->lnf", x_lne, w_in) + b_in        # (L, N, 3E)
    q, k, v = jnp.split(qkv, 3, axis=-1)
    q = q * (1.0 / math.sqrt(d))

    def heads(t):  # (L, N, E) -> (N*H, L, d)
        return jnp.transpose(t.reshape(L, N * n_head, d), (1, 0, 2))

    qh, kh, vh = heads(q), heads(k), heads(v)
    s = jnp.einsum("bld,bmd->blm", qh, kh)
    p = jax.nn.softmax(s, axis=-1)
    o = jnp.einsum("blm,bmd->bld", p, vh)                      # (N*H, L, d)
    o = jnp.transpose(o, (1, 0, 2)).reshape(L, N, E)
    return jnp.einsum("lne,fe->lnf", o, w_out) + b_out


if __name__ == "__main__":
    # Small shapes consistent with the module: seq=16, batch=2, emb=32, heads=4.
    L, N, E, H = 16, 2, 32, 4

    key = jax.random.PRNGKey(0)
    k_x, k_win, k_wout, k_bin, k_bout = jax.random.split(key, 5)

    x = jax.random.normal(k_x, (L, N, E), dtype=jnp.float32)

    # Xavier-uniform-like weights (matching nn.MultiheadAttention defaults),
    # plus small nonzero biases to exercise the bias paths.
    lim_in = math.sqrt(6.0 / (3 * E + E))
    w_in = jax.random.uniform(k_win, (3 * E, E), jnp.float32, -lim_in, lim_in)
    b_in = 0.1 * jax.random.normal(k_bin, (3 * E,), jnp.float32)
    lim_out = math.sqrt(6.0 / (E + E))
    w_out = jax.random.uniform(k_wout, (E, E), jnp.float32, -lim_out, lim_out)
    b_out = 0.1 * jax.random.normal(k_bout, (E,), jnp.float32)

    out = self_multihead_attention(x, w_in, b_in, w_out, b_out, n_head=H)
    out = jax.block_until_ready(out)

    ref = _reference(x, w_in, b_in, w_out, b_out, n_head=H)
    assert out.shape == (L, N, E)
    # Tolerance loosened for bf16 MXU matmuls + approx reciprocal.
    err = jnp.max(jnp.abs(out - ref))
    assert jnp.allclose(out, ref, atol=5e-2, rtol=5e-2), f"max abs err = {err}"

    print("KERNEL_OK")
</pallas_src>

<mosaic_0001>
module attributes {stable_mosaic.version = 11 : i64} {
  func.func @_qkv_proj_kernel(%arg0: i32, %arg1: memref<32x32xbf16, #tpu.memory_space<vmem>>, %arg2: memref<32x128xbf16, #tpu.memory_space<vmem>>, %arg3: memref<32x128xbf16, #tpu.memory_space<vmem>>, %arg4: memref<32x128xbf16, #tpu.memory_space<vmem>>, %arg5: memref<8x128xf32, #tpu.memory_space<vmem>>, %arg6: memref<32x128xbf16, #tpu.memory_space<vmem>>, %arg7: memref<32x128xbf16, #tpu.memory_space<vmem>>, %arg8: memref<32x128xbf16, #tpu.memory_space<vmem>>) attributes {dimension_semantics = [#tpu.dimension_semantics<parallel>], iteration_bounds = array<i64: 1>, scalar_prefetch = 0 : i64, scratch_operands = 0 : i64, tpu.core_type = #tpu.core_type<tc>, window_params = [{transform_indices = @transform_0, window_bounds = array<i64: 32, 32>}, {pipeline_mode = #tpu.pipeline_mode<synchronous>, transform_indices = @transform_1, window_bounds = array<i64: 32, 128>}, {pipeline_mode = #tpu.pipeline_mode<synchronous>, transform_indices = @transform_2, window_bounds = array<i64: 32, 128>}, {pipeline_mode = #tpu.pipeline_mode<synchronous>, transform_indices = @transform_3, window_bounds = array<i64: 32, 128>}, {pipeline_mode = #tpu.pipeline_mode<synchronous>, transform_indices = @transform_4, window_bounds = array<i64: 8, 128>}, {transform_indices = @transform_5, window_bounds = array<i64: 32, 128>}, {transform_indices = @transform_6, window_bounds = array<i64: 32, 128>}, {transform_indices = @transform_7, window_bounds = array<i64: 32, 128>}]} {
    %c0 = arith.constant 0 : index
    %c0_0 = arith.constant 0 : index
    %0 = vector.load %arg1[%c0, %c0_0] : memref<32x32xbf16, #tpu.memory_space<vmem>>, vector<32x32xbf16>
    %c0_1 = arith.constant 0 : index
    %c0_2 = arith.constant 0 : index
    %1 = vector.load %arg5[%c0_1, %c0_2] : memref<8x128xf32, #tpu.memory_space<vmem>>, vector<8x128xf32>
    %c0_3 = arith.constant 0 : index
    %c0_4 = arith.constant 0 : index
    %2 = vector.load %arg2[%c0_3, %c0_4] : memref<32x128xbf16, #tpu.memory_space<vmem>>, vector<32x128xbf16>
    %cst = arith.constant dense<0.000000e+00> : vector<32x128xf32>
    %3 = tpu.matmul %0, %2, %cst {dimension_numbers = #tpu.dot_dimension_numbers<[1], [0], [0], [1], [0, 0, 1, 1], [], []>} : vector<32x32xbf16>, vector<32x128xbf16>, vector<32x128xf32> -> vector<32x128xf32>
    %4 = vector.extract_strided_slice %1 {offsets = [0, 0], sizes = [1, 128], strides = [1, 1]} : vector<8x128xf32> to vector<1x128xf32>
    %5 = vector.broadcast %4 : vector<1x128xf32> to vector<32x128xf32>
    %6 = arith.addf %3, %5 : vector<32x128xf32>
    %c0_5 = arith.constant 0 : index
    %c0_6 = arith.constant 0 : index
    %7 = vector.load %arg3[%c0_5, %c0_6] : memref<32x128xbf16, #tpu.memory_space<vmem>>, vector<32x128xbf16>
    %cst_7 = arith.constant dense<0.000000e+00> : vector<32x128xf32>
    %8 = tpu.matmul %0, %7, %cst_7 {dimension_numbers = #tpu.dot_dimension_numbers<[1], [0], [0], [1], [0, 0, 1, 1], [], []>} : vector<32x32xbf16>, vector<32x128xbf16>, vector<32x128xf32> -> vector<32x128xf32>
    %9 = vector.extract_strided_slice %1 {offsets = [1, 0], sizes = [1, 128], strides = [1, 1]} : vector<8x128xf32> to vector<1x128xf32>
    %10 = vector.broadcast %9 : vector<1x128xf32> to vector<32x128xf32>
    %11 = arith.addf %8, %10 : vector<32x128xf32>
    %c0_8 = arith.constant 0 : index
    %c0_9 = arith.constant 0 : index
    %12 = vector.load %arg4[%c0_8, %c0_9] : memref<32x128xbf16, #tpu.memory_space<vmem>>, vector<32x128xbf16>
    %cst_10 = arith.constant dense<0.000000e+00> : vector<32x128xf32>
    %13 = tpu.matmul %0, %12, %cst_10 {dimension_numbers = #tpu.dot_dimension_numbers<[1], [0], [0], [1], [0, 0, 1, 1], [], []>} : vector<32x32xbf16>, vector<32x128xbf16>, vector<32x128xf32> -> vector<32x128xf32>
    %14 = vector.extract_strided_slice %1 {offsets = [2, 0], sizes = [1, 128], strides = [1, 1]} : vector<8x128xf32> to vector<1x128xf32>
    %15 = vector.broadcast %14 : vector<1x128xf32> to vector<32x128xf32>
    %16 = arith.addf %13, %15 : vector<32x128xf32>
    %17 = arith.truncf %6 : vector<32x128xf32> to vector<32x128xbf16>
    %c0_11 = arith.constant 0 : index
    %c0_12 = arith.constant 0 : index
    %18 = vector.load %arg6[%c0_11, %c0_12] : memref<32x128xbf16, #tpu.memory_space<vmem>>, vector<32x128xbf16>
    tpu.vector_store %arg6[%c0_11, %c0_12], %17 {strides = array<i32>} : memref<32x128xbf16, #tpu.memory_space<vmem>>, vector<32x128xbf16>,
    %19 = arith.truncf %11 : vector<32x128xf32> to vector<32x128xbf16>
    %c0_13 = arith.constant 0 : index
    %c0_14 = arith.constant 0 : index
    %20 = vector.load %arg7[%c0_13, %c0_14] : memref<32x128xbf16, #tpu.memory_space<vmem>>, vector<32x128xbf16>
    tpu.vector_store %arg7[%c0_13, %c0_14], %19 {strides = array<i32>} : memref<32x128xbf16, #tpu.memory_space<vmem>>, vector<32x128xbf16>,
    %21 = arith.truncf %16 : vector<32x128xf32> to vector<32x128xbf16>
    %c0_15 = arith.constant 0 : index
    %c0_16 = arith.constant 0 : index
    %22 = vector.load %arg8[%c0_15, %c0_16] : memref<32x128xbf16, #tpu.memory_space<vmem>>, vector<32x128xbf16>
    tpu.vector_store %arg8[%c0_15, %c0_16], %21 {strides = array<i32>} : memref<32x128xbf16, #tpu.memory_space<vmem>>, vector<32x128xbf16>,
    return
  }
  func.func @transform_0(%arg0: i32) -> (i32, i32) {
    %c0_i32 = arith.constant 0 : i32
    %c0_i32_0 = arith.constant 0 : i32
    return %arg0, %c0_i32 : i32, i32
  }
  func.func @transform_1(%arg0: i32) -> (i32, i32) {
    %c0_i32 = arith.constant 0 : i32
    %c0_i32_0 = arith.constant 0 : i32
    %c0_i32_1 = arith.constant 0 : i32
    return %c0_i32, %c0_i32_0 : i32, i32
  }
  func.func @transform_2(%arg0: i32) -> (i32, i32) {
    %c0_i32 = arith.constant 0 : i32
    %c0_i32_0 = arith.constant 0 : i32
    %c0_i32_1 = arith.constant 0 : i32
    return %c0_i32, %c0_i32_0 : i32, i32
  }
  func.func @transform_3(%arg0: i32) -> (i32, i32) {
    %c0_i32 = arith.constant 0 : i32
    %c0_i32_0 = arith.constant 0 : i32
    %c0_i32_1 = arith.constant 0 : i32
    return %c0_i32, %c0_i32_0 : i32, i32
  }
  func.func @transform_4(%arg0: i32) -> (i32, i32) {
    %c0_i32 = arith.constant 0 : i32
    %c0_i32_0 = arith.constant 0 : i32
    %c0_i32_1 = arith.constant 0 : i32
    return %c0_i32, %c0_i32_0 : i32, i32
  }
  func.func @transform_5(%arg0: i32) -> (i32, i32) {
    %c0_i32 = arith.constant 0 : i32
    %c0_i32_0 = arith.constant 0 : i32
    return %arg0, %c0_i32 : i32, i32
  }
  func.func @transform_6(%arg0: i32) -> (i32, i32) {
    %c0_i32 = arith.constant 0 : i32
    %c0_i32_0 = arith.constant 0 : i32
    return %arg0, %c0_i32 : i32, i32
  }
  func.func @transform_7(%arg0: i32) -> (i32, i32) {
    %c0_i32 = arith.constant 0 : i32
    %c0_i32_0 = arith.constant 0 : i32
    return %arg0, %c0_i32 : i32, i32
  }
}

</mosaic_0001>

<llo_original>
// kernel: tpu_custom_call.1
$region0: #{tpu_custom_call.1}
  #allocation0 [shape = 'u32[]', space=smem, size = 0x4, offset = 0x4, fixed_abs, tag = 'smem constant byte address 0x4 - core index']
  #allocation1 [shape = 'u32[144,128]{1,0:T(1,128)}', space=vmem, size = 0x12000, scoped, tag = 'internal scratch']
  %s0 = inlined_call_operand.hbm [shape: bf16[32,32], index: 0, kind: input, shape index: {}]
  %s1 = inlined_call_operand.hbm [shape: bf16[32,128], index: 1, kind: input, shape index: {}]
  %s2 = inlined_call_operand.hbm [shape: bf16[32,128], index: 2, kind: input, shape index: {}]
  %s3 = inlined_call_operand.hbm [shape: bf16[32,128], index: 3, kind: input, shape index: {}]
  %s4 = inlined_call_operand.vmem [shape: f32[8,128], index: 4, kind: input, shape index: {}]
  %s5 = inlined_call_operand.hbm [shape: bf16[32,128], index: 5, kind: output, shape index: {0}]
  %s6 = inlined_call_operand.hbm [shape: bf16[32,128], index: 6, kind: output, shape index: {1}]
  %s7 = inlined_call_operand.hbm [shape: bf16[32,128], index: 7, kind: output, shape index: {2}]
  %8 = xla_tuple %s5, %s6, %s7
  %s9 = sld [smem:[#allocation0]]
  $region62: #{tpu_custom_call.1} parent=0
    _
  %s11 = ssub.s32 1, %s9
  %s12 = scalar_select 0, %s11, %s9
  $region1: #{tpu_custom_call.1} parent=0
    #allocation2 [shape = 'u8[8192]{0}', space=vmem, size = 0x2000, scoped, tag = 'input window, operand 0, single buffered']
    #allocation3 [shape = 's32[1]{0}', space=sflag, size = 0x4, scoped, tag = 'scoped memory for tpu_custom_call.1']
    #allocation4 [shape = 's32[1]{0}', space=sflag, size = 0x4, scoped, tag = 'scoped memory for tpu_custom_call.1']
    #allocation5 [shape = 'u8[8192]{0}', space=vmem, size = 0x2000, scoped, tag = 'input window, operand 1, single buffered']
    #allocation6 [shape = 's32[1]{0}', space=sflag, size = 0x4, scoped, tag = 'scoped memory for tpu_custom_call.1']
    #allocation7 [shape = 'u8[8192]{0}', space=vmem, size = 0x2000, scoped, tag = 'input window, operand 2, single buffered']
    #allocation8 [shape = 'u8[8192]{0}', space=vmem, size = 0x2000, scoped, tag = 'input window, operand 3, single buffered']
    #allocation9 [shape = 's32[1]{0}', space=sflag, size = 0x4, scoped, tag = 'scoped memory for tpu_custom_call.1']
    #allocation10 [shape = 'u8[8192]{0}', space=vmem, size = 0x2000, scoped, tag = 'output window, operand 0, single buffered']
    #allocation11 [shape = 'u8[8192]{0}', space=vmem, size = 0x2000, scoped, tag = 'output window, operand 1, single buffered']
    #allocation12 [shape = 's32[1]{0}', space=sflag, size = 0x4, scoped, tag = 'scoped memory for tpu_custom_call.1']
    #allocation13 [shape = 'u8[8192]{0}', space=vmem, size = 0x2000, scoped, tag = 'output window, operand 2, single buffered']
    %13 = vsyncpa [#allocation3], 0
    %14 = vsyncpa [#allocation6], 0
    %15 = vsyncpa [#allocation9], 0
    %16 = vsyncpa [#allocation4], 0
    %17 = vsyncpa [#allocation12], 0
    // Predicated region
    $region2: #{tpu_custom_call.1} parent=1 // pred_check
      _
    $region3: #{tpu_custom_call.1} parent=1 // pred_check_branch
      %19 = sbr.rel (0) target = $region5
    $region4: #{tpu_custom_call.1} parent=1 // pred_region
      %s21 = ssub.s32 256, 256
      %22 = vsyncadd [#allocation3], %s21
      %s23 = sshll.u32 [#allocation2], 4
      %s24 = int_to_ptr.vmem [resolvable:$true] %s23
      %29 = dma.hbm_to_vmem [thread:$0]  %s0, 256, %s24, [#allocation3], 64, 64, 4
    $region5: #{tpu_custom_call.1} parent=1 // pred_fallthru
      _
    // Predicated region
    $region6: #{tpu_custom_call.1} parent=1 // pred_check
      _
    $region7: #{tpu_custom_call.1} parent=1 // pred_check_branch
      %31 = sbr.rel (0) target = $region9
    $region8: #{tpu_custom_call.1} parent=1 // pred_region
      %s33 = ssub.s32 256, 256
      %34 = vsyncadd [#allocation6], %s33
      %s35 = sshll.u32 [#allocation5], 4
      %s36 = int_to_ptr.vmem [resolvable:$true] %s35
      %41 = dma.hbm_to_vmem [thread:$0]  %s1, 256, %s36, [#allocation6], 64, 64, 4
    $region9: #{tpu_custom_call.1} parent=1 // pred_fallthru
      _
    // Predicated region
    $region10: #{tpu_custom_call.1} parent=1 // pred_check
      _
    $region11: #{tpu_custom_call.1} parent=1 // pred_check_branch
      %43 = sbr.rel (0) target = $region13
    $region12: #{tpu_custom_call.1} parent=1 // pred_region
      %s45 = ssub.s32 256, 256
      %46 = vsyncadd [#allocation6], %s45
      %s47 = sshll.u32 [#allocation7], 4
      %s48 = int_to_ptr.vmem [resolvable:$true] %s47
      %53 = dma.hbm_to_vmem [thread:$0]  %s2, 256, %s48, [#allocation6], 64, 64, 4
    $region13: #{tpu_custom_call.1} parent=1 // pred_fallthru
      _
    // Predicated region
    $region14: #{tpu_custom_call.1} parent=1 // pred_check
      _
    $region15: #{tpu_custom_call.1} parent=1 // pred_check_branch
      %55 = sbr.rel (0) target = $region17
    $region16: #{tpu_custom_call.1} parent=1 // pred_region
      %s57 = ssub.s32 256, 256
      %58 = vsyncadd [#allocation9], %s57
      %s59 = sshll.u32 [#allocation8], 4
      %s60 = int_to_ptr.vmem [resolvable:$true] %s59
      %65 = dma.hbm_to_vmem [thread:$0]  %s3, 256, %s60, [#allocation9], 64, 64, 4
    $region17: #{tpu_custom_call.1} parent=1 // pred_fallthru
      _
    // Predicated region
    $region18: #{tpu_custom_call.1} parent=1 // pred_check
      _
    $region19: #{tpu_custom_call.1} parent=1 // pred_check_branch
      %67 = sbr.rel (0) target = $region21
    $region20: #{tpu_custom_call.1} parent=1 // pred_region
      _
    $region21: #{tpu_custom_call.1} parent=1 // pred_fallthru
      _
    // Predicated region
    $region22: #{tpu_custom_call.1} parent=1 // pred_check
      _
    $region23: #{tpu_custom_call.1} parent=1 // pred_check_branch
      %69 = sbr.rel (0) target = $region25
    $region24: #{tpu_custom_call.1} parent=1 // pred_region
      %70 = dma.done [#allocation3], 256
    $region25: #{tpu_custom_call.1} parent=1 // pred_fallthru
      _
    // Predicated region
    $region26: #{tpu_custom_call.1} parent=1 // pred_check
      _
    $region27: #{tpu_custom_call.1} parent=1 // pred_check_branch
      %72 = sbr.rel (0) target = $region29
    $region28: #{tpu_custom_call.1} parent=1 // pred_region
      %73 = dma.done [#allocation6], 256
    $region29: #{tpu_custom_call.1} parent=1 // pred_fallthru
      _
    // Predicated region
    $region30: #{tpu_custom_call.1} parent=1 // pred_check
      _
    $region31: #{tpu_custom_call.1} parent=1 // pred_check_branch
      %75 = sbr.rel (0) target = $region33
    $region32: #{tpu_custom_call.1} parent=1 // pred_region
      %76 = dma.done [#allocation6], 256
    $region33: #{tpu_custom_call.1} parent=1 // pred_fallthru
      _
    // Predicated region
    $region34: #{tpu_custom_call.1} parent=1 // pred_check
      _
    $region35: #{tpu_custom_call.1} parent=1 // pred_check_branch
      %78 = sbr.rel (0) target = $region37
    $region36: #{tpu_custom_call.1} parent=1 // pred_region
      %79 = dma.done [#allocation9], 256
    $region37: #{tpu_custom_call.1} parent=1 // pred_fallthru
      _
    %v81 = vld [vmem:[#allocation2] sm:$0xf]
    %v82 = vld [vmem:[#allocation2 + $0x4] sm:$0xf]
    %v83 = vld [vmem:[#allocation2 + $0x8] sm:$0xf]
    %v84 = vld [vmem:[#allocation2 + $0xc] sm:$0xf]
    %v85 = vld [vmem:[%s4] sm:$0xff]
    %v86 = vld [vmem:[#allocation5] sm:$0xf]
    %v87 = vld [vmem:[#allocation5 + $0x4] sm:$0xf]
    %v88 = vld [vmem:[#allocation5 + $0x8] sm:$0xf]
    %v89 = vld [vmem:[#allocation5 + $0xc] sm:$0xf]
    %v90 = vlaneseq
    %v91 = vshrl.u32 %v90, 7
    %v92 = vsub.s32 0, %v91
    %v93 = vrot.slane %v85, %v92
    %v98 = vunpack.c.l.b16 %v81
    %v99 = vunpack.c.l.b16 %v82
    %v100 = vunpack.c.l.b16 %v83
    %v101 = vunpack.c.l.b16 %v84
    %v102 = vpack.c.b16 %v99, %v98
    %v103 = vpack.c.b16 %v101, %v100
    %v108 = vunpack.c.l.b16 %v86
    %v109 = vunpack.c.l.b16 %v87
    %v110 = vunpack.c.l.b16 %v88
    %v111 = vunpack.c.l.b16 %v89
    %v112 = vpack.c.b16 %v109, %v108
    %v113 = vpack.c.b16 %v111, %v110
    %vm116 = vcmask 261120
    %v118 = vsel %vm116, %v102, 0
    %v121 = vsel %vm116, %v103, 0
    %123 = vmatprep.subr.bf16.mxu0 0
    %124 = vmatpush1.bf16.msra.mxu0 %v112
    %125 = vmatprep.subr.bf16.mxu0 0
    %126 = vmatpush1.bf16.msra.mxu0 %v113
    %127 = vmatprep.subr.bf16.mxu0 0
    %128 = vmatpush1.bf16.msra.mxu0 0
    %129 = vmatprep.subr.bf16.mxu0 0
    %130 = vmatpush1.bf16.msra.mxu0 0
    %131 = vmatprep.subr.bf16.mxu0 0
    %132 = vmatpush1.bf16.msra.mxu0 0
    %133 = vmatprep.subr.bf16.mxu0 0
    %134 = vmatpush1.bf16.msra.mxu0 0
    %135 = vmatprep.subr.bf16.mxu0 0
    %136 = vmatpush1.bf16.msra.mxu0 0
    %137 = vmatprep.subr.bf16.mxu0 0
    %138 = vmatpush1.bf16.msra.mxu0 0
    %139 = vmatprep.subr.bf16.mxu0 0
    %140 = vmatpush1.bf16.msra.mxu0 0
    %141 = vmatprep.subr.bf16.mxu0 0
    %142 = vmatpush1.bf16.msra.mxu0 0
    %143 = vmatprep.subr.bf16.mxu0 0
    %144 = vmatpush1.bf16.msra.mxu0 0
    %145 = vmatprep.subr.bf16.mxu0 0
    %146 = vmatpush1.bf16.msra.mxu0 0
    %147 = vmatprep.subr.bf16.mxu0 0
    %148 = vmatpush1.bf16.msra.mxu0 0
    %149 = vmatprep.subr.bf16.mxu0 0
    %150 = vmatpush1.bf16.msra.mxu0 0
    %151 = vmatprep.subr.bf16.mxu0 0
    %152 = vmatpush1.bf16.msra.mxu0 0
    %153 = vmatprep.subr.bf16.mxu0 0
    %154 = vmatpush1.bf16.msra.mxu0 0
    %155 = vmatprep.mubr.bf16.mxu0 0
    %156 = vmatmul.mubr.bf16.gmra.mrb[0].mxu0 %v118
    %v157 = vpop.f32.mrb[0].mxu0
    %v158 = vadd.f32 %v93, %v157
    %v159 = vpop.f32.mrb[0].mxu0
    %v160 = vpop.f32.mrb[0].mxu0
    %v161 = vadd.f32 %v93, %v160
    %v162 = vpop.f32.mrb[0].mxu0
    %163 = vmatprep.mubr.bf16.mxu0 0
    %164 = vmatmul.mubr.bf16.gmra.mrb[0].mxu0 %v121
    %v165 = vpop.f32.mrb[0].mxu0
    %v166 = vadd.f32 %v93, %v165
    %v167 = vpop.f32.mrb[0].mxu0
    %v168 = vpop.f32.mrb[0].mxu0
    %v169 = vadd.f32 %v93, %v168
    %v170 = vpop.f32.mrb[0].mxu0
    %171 = vdwg.mxu0
    %v172 = vld [vmem:[#allocation7] sm:$0xf]
    %v173 = vld [vmem:[#allocation7 + $0x4] sm:$0xf]
    %v174 = vld [vmem:[#allocation7 + $0x8] sm:$0xf]
    %v175 = vld [vmem:[#allocation7 + $0xc] sm:$0xf]
    %v176 = vlaneseq
    %v177 = vshrl.u32 %v176, 7
    %v178 = vsub.s32 1, %v177
    %v179 = vrot.slane %v85, %v178
    %v184 = vunpack.c.l.b16 %v172
    %v185 = vunpack.c.l.b16 %v173
    %v186 = vunpack.c.l.b16 %v174
    %v187 = vunpack.c.l.b16 %v175
    %v188 = vpack.c.b16 %v185, %v184
    %v189 = vpack.c.b16 %v187, %v186
    %192 = vmatprep.subr.bf16.mxu0 0
    %193 = vmatpush1.bf16.msra.mxu0 %v188
    %194 = vmatprep.subr.bf16.mxu0 0
    %195 = vmatpush1.bf16.msra.mxu0 %v189
    %196 = vmatprep.subr.bf16.mxu0 0
    %197 = vmatpush1.bf16.msra.mxu0 0
    %198 = vmatprep.subr.bf16.mxu0 0
    %199 = vmatpush1.bf16.msra.mxu0 0
    %200 = vmatprep.subr.bf16.mxu0 0
    %201 = vmatpush1.bf16.msra.mxu0 0
    %202 = vmatprep.subr.bf16.mxu0 0
    %203 = vmatpush1.bf16.msra.mxu0 0
    %204 = vmatprep.subr.bf16.mxu0 0
    %205 = vmatpush1.bf16.msra.mxu0 0
    %206 = vmatprep.subr.bf16.mxu0 0
    %207 = vmatpush1.bf16.msra.mxu0 0
    %208 = vmatprep.subr.bf16.mxu0 0
    %209 = vmatpush1.bf16.msra.mxu0 0
    %210 = vmatprep.subr.bf16.mxu0 0
    %211 = vmatpush1.bf16.msra.mxu0 0
    %212 = vmatprep.subr.bf16.mxu0 0
    %213 = vmatpush1.bf16.msra.mxu0 0
    %214 = vmatprep.subr.bf16.mxu0 0
    %215 = vmatpush1.bf16.msra.mxu0 0
    %216 = vmatprep.subr.bf16.mxu0 0
    %217 = vmatpush1.bf16.msra.mxu0 0
    %218 = vmatprep.subr.bf16.mxu0 0
    %219 = vmatpush1.bf16.msra.mxu0 0
    %220 = vmatprep.subr.bf16.mxu0 0
    %221 = vmatpush1.bf16.msra.mxu0 0
    %222 = vmatprep.subr.bf16.mxu0 0
    %223 = vmatpush1.bf16.msra.mxu0 0
    %224 = vmatprep.mubr.bf16.mxu0 0
    %225 = vmatmul.mubr.bf16.gmra.mrb[0].mxu0 %v118
    %v226 = vpop.f32.mrb[0].mxu0
    %v227 = vadd.f32 %v179, %v226
    %v228 = vpop.f32.mrb[0].mxu0
    %v229 = vpop.f32.mrb[0].mxu0
    %v230 = vadd.f32 %v179, %v229
    %v231 = vpop.f32.mrb[0].mxu0
    %232 = vmatprep.mubr.bf16.mxu0 0
    %233 = vmatmul.mubr.bf16.gmra.mrb[0].mxu0 %v121
    %v234 = vpop.f32.mrb[0].mxu0
    %v235 = vadd.f32 %v179, %v234
    %v236 = vpop.f32.mrb[0].mxu0
    %v237 = vpop.f32.mrb[0].mxu0
    %v238 = vadd.f32 %v179, %v237
    %v239 = vpop.f32.mrb[0].mxu0
    %240 = vdwg.mxu0
    %v241 = vld [vmem:[#allocation8] sm:$0xf]
    %v242 = vld [vmem:[#allocation8 + $0x4] sm:$0xf]
    %v243 = vld [vmem:[#allocation8 + $0x8] sm:$0xf]
    %v244 = vld [vmem:[#allocation8 + $0xc] sm:$0xf]
    %v245 = vlaneseq
    %v246 = vshrl.u32 %v245, 7
    %v247 = vsub.s32 2, %v246
    %v248 = vrot.slane %v85, %v247
    %v253 = vunpack.c.l.b16 %v241
    %v254 = vunpack.c.l.b16 %v242
    %v255 = vunpack.c.l.b16 %v243
    %v256 = vunpack.c.l.b16 %v244
    %v257 = vpack.c.b16 %v254, %v253
    %v258 = vpack.c.b16 %v256, %v255
    %261 = vmatprep.subr.bf16.mxu0 0
    %262 = vmatpush1.bf16.msra.mxu0 %v257
    %263 = vmatprep.subr.bf16.mxu0 0
    %264 = vmatpush1.bf16.msra.mxu0 %v258
    %265 = vmatprep.subr.bf16.mxu0 0
    %266 = vmatpush1.bf16.msra.mxu0 0
    %267 = vmatprep.subr.bf16.mxu0 0
    %268 = vmatpush1.bf16.msra.mxu0 0
    %269 = vmatprep.subr.bf16.mxu0 0
    %270 = vmatpush1.bf16.msra.mxu0 0
    %271 = vmatprep.subr.bf16.mxu0 0
    %272 = vmatpush1.bf16.msra.mxu0 0
    %273 = vmatprep.subr.bf16.mxu0 0
    %274 = vmatpush1.bf16.msra.mxu0 0
    %275 = vmatprep.subr.bf16.mxu0 0
    %276 = vmatpush1.bf16.msra.mxu0 0
    %277 = vmatprep.subr.bf16.mxu0 0
    %278 = vmatpush1.bf16.msra.mxu0 0
    %279 = vmatprep.subr.bf16.mxu0 0
    %280 = vmatpush1.bf16.msra.mxu0 0
    %281 = vmatprep.subr.bf16.mxu0 0
    %282 = vmatpush1.bf16.msra.mxu0 0
    %283 = vmatprep.subr.bf16.mxu0 0
    %284 = vmatpush1.bf16.msra.mxu0 0
    %285 = vmatprep.subr.bf16.mxu0 0
    %286 = vmatpush1.bf16.msra.mxu0 0
    %287 = vmatprep.subr.bf16.mxu0 0
    %288 = vmatpush1.bf16.msra.mxu0 0
    %289 = vmatprep.subr.bf16.mxu0 0
    %290 = vmatpush1.bf16.msra.mxu0 0
    %291 = vmatprep.subr.bf16.mxu0 0
    %292 = vmatpush1.bf16.msra.mxu0 0
    %293 = vmatprep.mubr.bf16.mxu0 0
    %294 = vmatmul.mubr.bf16.gmra.mrb[0].mxu0 %v118
    %v295 = vpop.f32.mrb[0].mxu0
    %v296 = vadd.f32 %v248, %v295
    %v297 = vpop.f32.mrb[0].mxu0
    %v298 = vpop.f32.mrb[0].mxu0
    %v299 = vadd.f32 %v248, %v298
    %v300 = vpop.f32.mrb[0].mxu0
    %301 = vmatprep.mubr.bf16.mxu0 0
    %302 = vmatmul.mubr.bf16.gmra.mrb[0].mxu0 %v121
    %v303 = vpop.f32.mrb[0].mxu0
    %v304 = vadd.f32 %v248, %v303
    %v305 = vpop.f32.mrb[0].mxu0
    %v306 = vpop.f32.mrb[0].mxu0
    %v307 = vadd.f32 %v248, %v306
    %v308 = vpop.f32.mrb[0].mxu0
    %309 = vdwg.mxu0
    %v310 = vpack.c.bf16 %v161, %v158
    %v311 = vpack.c.bf16 %v169, %v166
    %v314 = vunpack.c.l.b16 %v310
    %v315 = vunpack.c.h.b16 %v310
    %v316 = vunpack.c.l.b16 %v311
    %v317 = vunpack.c.h.b16 %v311
    %v318 = vpack.c.b16 %v314, %v314
    %v319 = vpack.c.b16 %v315, %v315
    %v320 = vpack.c.b16 %v316, %v316
    %v321 = vpack.c.b16 %v317, %v317
    %326 = vst [vmem:[#allocation10] sm:$0xf] %v318
    %327 = vst [vmem:[#allocation10 + $0x4] sm:$0xf] %v319
    %328 = vst [vmem:[#allocation10 + $0x8] sm:$0xf] %v320
    %329 = vst [vmem:[#allocation10 + $0xc] sm:$0xf] %v321
    %v330 = vpack.c.bf16 %v230, %v227
    %v331 = vpack.c.bf16 %v238, %v235
    %v334 = vunpack.c.l.b16 %v330
    %v335 = vunpack.c.h.b16 %v330
    %v336 = vunpack.c.l.b16 %v331
    %v337 = vunpack.c.h.b16 %v331
    %v338 = vpack.c.b16 %v334, %v334
    %v339 = vpack.c.b16 %v335, %v335
    %v340 = vpack.c.b16 %v336, %v336
    %v341 = vpack.c.b16 %v337, %v337
    %346 = vst [vmem:[#allocation11] sm:$0xf] %v338
    %347 = vst [vmem:[#allocation11 + $0x4] sm:$0xf] %v339
    %348 = vst [vmem:[#allocation11 + $0x8] sm:$0xf] %v340
    %349 = vst [vmem:[#allocation11 + $0xc] sm:$0xf] %v341
    %v350 = vpack.c.bf16 %v299, %v296
    %v351 = vpack.c.bf16 %v307, %v304
    %v354 = vunpack.c.l.b16 %v350
    %v355 = vunpack.c.h.b16 %v350
    %v356 = vunpack.c.l.b16 %v351
    %v357 = vunpack.c.h.b16 %v351
    %v358 = vpack.c.b16 %v354, %v354
    %v359 = vpack.c.b16 %v355, %v355
    %v360 = vpack.c.b16 %v356, %v356
    %v361 = vpack.c.b16 %v357, %v357
    %366 = vst [vmem:[#allocation13] sm:$0xf] %v358
    %367 = vst [vmem:[#allocation13 + $0x4] sm:$0xf] %v359
    %368 = vst [vmem:[#allocation13 + $0x8] sm:$0xf] %v360
    %369 = vst [vmem:[#allocation13 + $0xc] sm:$0xf] %v361
    // Predicated region
    $region38: #{tpu_custom_call.1} parent=1 // pred_check
      _
    $region39: #{tpu_custom_call.1} parent=1 // pred_check_branch
      %371 = sbr.rel (0) target = $region41
    $region40: #{tpu_custom_call.1} parent=1 // pred_region
      %s373 = ssub.s32 256, 256
      %374 = vsyncadd [#allocation4], %s373
      %s375 = sshll.u32 [#allocation10], 4
      %s376 = int_to_ptr.vmem [resolvable:$true] %s375
      %381 = dma.vmem_to_hbm [thread:$0]  %s376, 256, %s5, [#allocation4], 64, 64, 4
    $region41: #{tpu_custom_call.1} parent=1 // pred_fallthru
      _
    // Predicated region
    $region42: #{tpu_custom_call.1} parent=1 // pred_check
      _
    $region43: #{tpu_custom_call.1} parent=1 // pred_check_branch
      %383 = sbr.rel (0) target = $region45
    $region44: #{tpu_custom_call.1} parent=1 // pred_region
      %s385 = ssub.s32 256, 256
      %386 = vsyncadd [#allocation12], %s385
      %s387 = sshll.u32 [#allocation11], 4
      %s388 = int_to_ptr.vmem [resolvable:$true] %s387
      %393 = dma.vmem_to_hbm [thread:$0]  %s388, 256, %s6, [#allocation12], 64, 64, 4
    $region45: #{tpu_custom_call.1} parent=1 // pred_fallthru
      _
    // Predicated region
    $region46: #{tpu_custom_call.1} parent=1 // pred_check
      _
    $region47: #{tpu_custom_call.1} parent=1 // pred_check_branch
      %395 = sbr.rel (0) target = $region49
    $region48: #{tpu_custom_call.1} parent=1 // pred_region
      %s397 = ssub.s32 256, 256
      %398 = vsyncadd [#allocation12], %s397
      %s399 = sshll.u32 [#allocation13], 4
      %s400 = int_to_ptr.vmem [resolvable:$true] %s399
      %405 = dma.vmem_to_hbm [thread:$0]  %s400, 256, %s7, [#allocation12], 64, 64, 4
    $region49: #{tpu_custom_call.1} parent=1 // pred_fallthru
      _
    // Predicated region
    $region50: #{tpu_custom_call.1} parent=1 // pred_check
      _
    $region51: #{tpu_custom_call.1} parent=1 // pred_check_branch
      %407 = sbr.rel (0) target = $region53
    $region52: #{tpu_custom_call.1} parent=1 // pred_region
      %408 = dma.done [#allocation4], 256
    $region53: #{tpu_custom_call.1} parent=1 // pred_fallthru
      _
    // Predicated region
    $region54: #{tpu_custom_call.1} parent=1 // pred_check
      _
    $region55: #{tpu_custom_call.1} parent=1 // pred_check_branch
      %410 = sbr.rel (0) target = $region57
    $region56: #{tpu_custom_call.1} parent=1 // pred_region
      %411 = dma.done [#allocation12], 256
    $region57: #{tpu_custom_call.1} parent=1 // pred_fallthru
      _
    // Predicated region
    $region58: #{tpu_custom_call.1} parent=1 // pred_check
      _
    $region59: #{tpu_custom_call.1} parent=1 // pred_check_branch
      %413 = sbr.rel (0) target = $region61
    $region60: #{tpu_custom_call.1} parent=1 // pred_region
      %414 = dma.done [#allocation12], 256
    $region61: #{tpu_custom_call.1} parent=1 // pred_fallthru
      _
    %415 = vsyncpa [#allocation3], 1
    %416 = vsyncpa [#allocation6], 1
    %417 = vsyncpa [#allocation9], 1
    %418 = vsyncpa [#allocation4], 1
    %419 = vsyncpa [#allocation12], 1

</llo_original>
